<compile_context>
chip_gen: v5e
topology: v5e:2x2
jax: 0.10.0
libtpu: 0.0.40
codegen_flags: <defaults>
</compile_context>

<pallas_src>
import jax
import jax.numpy as jnp
import numpy as np
from jax.experimental import pallas as pl
from jax.experimental.pallas import tpu as pltpu


def _round_up(x, m):
    return (x + m - 1) // m * m


def critic_adv_kernel(x_ref, w1_ref, b1_ref, w2_ref, b2_ref, w3_ref, b3_ref, o_ref):
    # x_ref : (state_dim, TB)   activations, batch on lanes
    # w1_ref: (mid, state_dim)  b1_ref: (mid, 1)
    # w2_ref: (mid, mid)        b2_ref: (mid, 1)
    # w3_ref: (mid, 1)          b3_ref: (1, 1) in SMEM
    # o_ref : (1, TB)           lane-dense output slab
    x = x_ref[...]

    h1 = jnp.dot(w1_ref[...], x, preferred_element_type=jnp.float32) + b1_ref[...]
    h1 = jnp.maximum(h1, 0.0)                                    # (mid, TB)

    h2 = jnp.dot(w2_ref[...], h1, preferred_element_type=jnp.float32) + b2_ref[...]
    h2 = jnp.maximum(h2, 0.0)                                    # (mid, TB)

    # Layer 3 (mid -> 1): VPU multiply + XLU sublane reduce; avoids an N=1 MXU
    # matmul whose systolic push/drain is pure latency for ~no work.
    q = jnp.sum(h2 * w3_ref[...], axis=0, keepdims=True) + b3_ref[0, 0]   # (1, TB)
    o_ref[...] = q.astype(o_ref.dtype)


def critic_adv_forward(s, params, tile_b=None):
    """s: (B, state_dim) f32. Returns (B, 1) f32."""
    w1, b1, w2, b2, w3, b3 = params
    B, state_dim = s.shape
    mid = w1.shape[0]

    # Lane tile over the batch: >=128 (full lane width), cap at 512 per step.
    if tile_b is None:
        tile_b = min(512, _round_up(B, 128))
    assert tile_b % 128 == 0
    b_pad = _round_up(B, tile_b)
    grid = (b_pad // tile_b,)

    # Transpose to (features, batch) and pad batch up to the tile multiple.
    # Padded lanes compute garbage that is sliced off below.
    x_t = jnp.pad(s.T, ((0, 0), (0, b_pad - B)))                 # (state_dim, b_pad)

    # Weights/biases: constant index_map -> fetched once, VMEM-resident across
    # all grid steps (only x/out tiles are double-buffered).
    def resident(a):
        nd = a.ndim
        return pl.BlockSpec(a.shape, lambda i, _nd=nd: (0,) * _nd)

    out_t = pl.pallas_call(
        critic_adv_kernel,
        out_shape=jax.ShapeDtypeStruct((1, b_pad), jnp.float32),
        grid=grid,
        in_specs=[
            pl.BlockSpec((state_dim, tile_b), lambda i: (0, i)),     # x tile
            resident(w1), resident(b1),
            resident(w2), resident(b2),
            resident(w3),
            pl.BlockSpec(memory_space=pltpu.MemorySpace.SMEM),       # b3 scalar
        ],
        out_specs=pl.BlockSpec((1, tile_b), lambda i: (0, i)),       # lane-dense
        compiler_params=pltpu.CompilerParams(
            dimension_semantics=("parallel",)),                      # 2x TC on v7x
    )(x_t, w1, b1, w2, b2, w3, b3)

    return out_t[0, :B].reshape(B, 1)


def init_params(key, state_dim, mid_dim):
    """Synthetic init mimicking the PyTorch module (weights stored (out, in)).

    Layers 1-2: nn.Linear default (uniform +-1/sqrt(fan_in)).
    Layer 3:    orthogonal weight (std=1.0), bias = 1e-6 (layer_norm helper).
    Biases stored as (out, 1) for lane-broadcast in the transposed layout.
    """
    k1, k2, k3, k4, k5 = jax.random.split(key, 5)

    lim1 = 1.0 / np.sqrt(state_dim)
    w1 = jax.random.uniform(k1, (mid_dim, state_dim), jnp.float32, -lim1, lim1)
    b1 = jax.random.uniform(k2, (mid_dim, 1), jnp.float32, -lim1, lim1)

    lim2 = 1.0 / np.sqrt(mid_dim)
    w2 = jax.random.uniform(k3, (mid_dim, mid_dim), jnp.float32, -lim2, lim2)
    b2 = jax.random.uniform(k4, (mid_dim, 1), jnp.float32, -lim2, lim2)

    # orthogonal init of the (1, mid) PyTorch weight, stored as (mid, 1)
    a = jax.random.normal(k5, (mid_dim, 1), jnp.float32)
    qmat, r = jnp.linalg.qr(a)
    qmat = qmat * jnp.sign(jnp.diagonal(r))
    w3 = qmat.astype(jnp.float32)                                 # (mid, 1)
    b3 = jnp.full((1, 1), 1e-6, jnp.float32)

    return (w1, b1, w2, b2, w3, b3)


def reference_forward(s, params):
    w1, b1, w2, b2, w3, b3 = params
    h1 = jnp.maximum(s @ w1.T + b1.T, 0.0)
    h2 = jnp.maximum(h1 @ w2.T + b2.T, 0.0)
    return h2 @ w3 + b3


if __name__ == "__main__":
    key = jax.random.PRNGKey(0)
    k_params, k_x, k_x2 = jax.random.split(key, 3)

    batch, state_dim, mid_dim = 8, 16, 32
    params = init_params(k_params, state_dim, mid_dim)
    s = jax.random.normal(k_x, (batch, state_dim), jnp.float32)

    q = jax.block_until_ready(critic_adv_forward(s, params))
    q_ref = reference_forward(s, params)
    np.testing.assert_allclose(np.asarray(q), np.asarray(q_ref), rtol=1e-5, atol=1e-5)
    assert q.shape == (batch, 1) and q.dtype == jnp.float32

    # Second check: non-multiple batch with multiple grid steps (padding + pipelining path).
    batch2 = 300
    s2 = jax.random.normal(k_x2, (batch2, state_dim), jnp.float32)
    q2 = jax.block_until_ready(critic_adv_forward(s2, params, tile_b=128))
    q2_ref = reference_forward(s2, params)
    np.testing.assert_allclose(np.asarray(q2), np.asarray(q2_ref), rtol=1e-5, atol=1e-5)
    assert q2.shape == (batch2, 1)

    print("KERNEL_OK")
</pallas_src>

<mosaic_0001>
module attributes {stable_mosaic.version = 11 : i64} {
  func.func @critic_adv_kernel(%arg0: i32, %arg1: memref<16x128xf32, #tpu.memory_space<vmem>>, %arg2: memref<32x16xf32, #tpu.memory_space<vmem>>, %arg3: memref<32x1xf32, #tpu.memory_space<vmem>>, %arg4: memref<32x32xf32, #tpu.memory_space<vmem>>, %arg5: memref<32x1xf32, #tpu.memory_space<vmem>>, %arg6: memref<32x1xf32, #tpu.memory_space<vmem>>, %arg7: memref<1x1xf32, #tpu.memory_space<smem>>, %arg8: memref<1x128xf32, #tpu.memory_space<vmem>>) attributes {dimension_semantics = [#tpu.dimension_semantics<parallel>], iteration_bounds = array<i64: 1>, scalar_prefetch = 0 : i64, scratch_operands = 0 : i64, tpu.core_type = #tpu.core_type<tc>, window_params = [{transform_indices = @transform_0, window_bounds = array<i64: 16, 128>}, {pipeline_mode = #tpu.pipeline_mode<synchronous>, transform_indices = @transform_1, window_bounds = array<i64: 32, 16>}, {pipeline_mode = #tpu.pipeline_mode<synchronous>, transform_indices = @transform_2, window_bounds = array<i64: 32, 1>}, {pipeline_mode = #tpu.pipeline_mode<synchronous>, transform_indices = @transform_3, window_bounds = array<i64: 32, 32>}, {pipeline_mode = #tpu.pipeline_mode<synchronous>, transform_indices = @transform_4, window_bounds = array<i64: 32, 1>}, {pipeline_mode = #tpu.pipeline_mode<synchronous>, transform_indices = @transform_5, window_bounds = array<i64: 32, 1>}, {transform_indices = @transform_6, window_bounds = array<i64: 1, 1>}, {transform_indices = @transform_7, window_bounds = array<i64: 1, 128>}]} {
    %c0 = arith.constant 0 : index
    %c0_0 = arith.constant 0 : index
    %0 = vector.load %arg1[%c0, %c0_0] : memref<16x128xf32, #tpu.memory_space<vmem>>, vector<16x128xf32>
    %c0_1 = arith.constant 0 : index
    %c0_2 = arith.constant 0 : index
    %1 = vector.load %arg2[%c0_1, %c0_2] : memref<32x16xf32, #tpu.memory_space<vmem>>, vector<32x16xf32>
    %cst = arith.constant dense<0.000000e+00> : vector<32x128xf32>
    %2 = tpu.matmul %1, %0, %cst {dimension_numbers = #tpu.dot_dimension_numbers<[1], [0], [0], [1], [0, 0, 1, 1], [], []>} : vector<32x16xf32>, vector<16x128xf32>, vector<32x128xf32> -> vector<32x128xf32>
    %c0_3 = arith.constant 0 : index
    %c0_4 = arith.constant 0 : index
    %3 = vector.load %arg3[%c0_3, %c0_4] : memref<32x1xf32, #tpu.memory_space<vmem>>, vector<32x1xf32>
    %4 = vector.broadcast %3 : vector<32x1xf32> to vector<32x128xf32>
    %5 = arith.addf %2, %4 : vector<32x128xf32>
    %cst_5 = arith.constant 0.000000e+00 : f32
    %6 = vector.broadcast %cst_5 : f32 to vector<32x128xf32>
    %7 = arith.maximumf %5, %6 : vector<32x128xf32>
    %c0_6 = arith.constant 0 : index
    %c0_7 = arith.constant 0 : index
    %8 = vector.load %arg4[%c0_6, %c0_7] : memref<32x32xf32, #tpu.memory_space<vmem>>, vector<32x32xf32>
    %cst_8 = arith.constant dense<0.000000e+00> : vector<32x128xf32>
    %9 = tpu.matmul %8, %7, %cst_8 {dimension_numbers = #tpu.dot_dimension_numbers<[1], [0], [0], [1], [0, 0, 1, 1], [], []>} : vector<32x32xf32>, vector<32x128xf32>, vector<32x128xf32> -> vector<32x128xf32>
    %c0_9 = arith.constant 0 : index
    %c0_10 = arith.constant 0 : index
    %10 = vector.load %arg5[%c0_9, %c0_10] : memref<32x1xf32, #tpu.memory_space<vmem>>, vector<32x1xf32>
    %11 = vector.broadcast %10 : vector<32x1xf32> to vector<32x128xf32>
    %12 = arith.addf %9, %11 : vector<32x128xf32>
    %cst_11 = arith.constant 0.000000e+00 : f32
    %13 = vector.broadcast %cst_11 : f32 to vector<32x128xf32>
    %14 = arith.maximumf %12, %13 : vector<32x128xf32>
    %c0_12 = arith.constant 0 : index
    %c0_13 = arith.constant 0 : index
    %15 = vector.load %arg6[%c0_12, %c0_13] : memref<32x1xf32, #tpu.memory_space<vmem>>, vector<32x1xf32>
    %16 = vector.broadcast %15 : vector<32x1xf32> to vector<32x128xf32>
    %17 = arith.mulf %14, %16 : vector<32x128xf32>
    %cst_14 = arith.constant dense<0.000000e+00> : vector<128xf32>
    %18 = vector.multi_reduction <add>, %17, %cst_14 [0] : vector<32x128xf32> to vector<128xf32>
    %19 = vector.shape_cast %18 : vector<128xf32> to vector<1x128xf32>
    %c0_15 = arith.constant 0 : index
    %c0_16 = arith.constant 0 : index
    %20 = memref.load %arg7[%c0_15, %c0_16] : memref<1x1xf32, #tpu.memory_space<smem>>
    %21 = vector.broadcast %20 : f32 to vector<1x128xf32>
    %22 = arith.addf %19, %21 : vector<1x128xf32>
    %c0_17 = arith.constant 0 : index
    %c0_18 = arith.constant 0 : index
    %23 = vector.load %arg8[%c0_17, %c0_18] : memref<1x128xf32, #tpu.memory_space<vmem>>, vector<1x128xf32>
    tpu.vector_store %arg8[%c0_17, %c0_18], %22 {strides = array<i32>} : memref<1x128xf32, #tpu.memory_space<vmem>>, vector<1x128xf32>,
    return
  }
  func.func @transform_0(%arg0: i32) -> (i32, i32) {
    %c0_i32 = arith.constant 0 : i32
    %c0_i32_0 = arith.constant 0 : i32
    return %c0_i32, %arg0 : i32, i32
  }
  func.func @transform_1(%arg0: i32) -> (i32, i32) {
    %c0_i32 = arith.constant 0 : i32
    %c0_i32_0 = arith.constant 0 : i32
    %c0_i32_1 = arith.constant 0 : i32
    return %c0_i32, %c0_i32_0 : i32, i32
  }
  func.func @transform_2(%arg0: i32) -> (i32, i32) {
    %c0_i32 = arith.constant 0 : i32
    %c0_i32_0 = arith.constant 0 : i32
    %c0_i32_1 = arith.constant 0 : i32
    return %c0_i32, %c0_i32_0 : i32, i32
  }
  func.func @transform_3(%arg0: i32) -> (i32, i32) {
    %c0_i32 = arith.constant 0 : i32
    %c0_i32_0 = arith.constant 0 : i32
    %c0_i32_1 = arith.constant 0 : i32
    return %c0_i32, %c0_i32_0 : i32, i32
  }
  func.func @transform_4(%arg0: i32) -> (i32, i32) {
    %c0_i32 = arith.constant 0 : i32
    %c0_i32_0 = arith.constant 0 : i32
    %c0_i32_1 = arith.constant 0 : i32
    return %c0_i32, %c0_i32_0 : i32, i32
  }
  func.func @transform_5(%arg0: i32) -> (i32, i32) {
    %c0_i32 = arith.constant 0 : i32
    %c0_i32_0 = arith.constant 0 : i32
    %c0_i32_1 = arith.constant 0 : i32
    return %c0_i32, %c0_i32_0 : i32, i32
  }
  func.func @transform_6(%arg0: i32) -> (i32, i32) {
    %c0_i32 = arith.constant 0 : i32
    %c0_i32_0 = arith.constant 0 : i32
    %c0_i32_1 = arith.constant 0 : i32
    return %c0_i32, %c0_i32_0 : i32, i32
  }
  func.func @transform_7(%arg0: i32) -> (i32, i32) {
    %c0_i32 = arith.constant 0 : i32
    %c0_i32_0 = arith.constant 0 : i32
    return %c0_i32, %arg0 : i32, i32
  }
}

</mosaic_0001>

<llo_original>
// kernel: tpu_custom_call.1
$region0: #{tpu_custom_call.1}
  #allocation0 [shape = 'u32[]', space=smem, size = 0x4, offset = 0x4, fixed_abs, tag = 'smem constant byte address 0x4 - core index']
  #allocation1 [shape = 'u32[72,128]{1,0:T(1,128)}', space=vmem, size = 0x9000, scoped, tag = 'internal scratch']
  #allocation2 [shape = 'f32[1,1]{1,0:T(1,128)S(6)}', space=smem, size = 0x200, scoped, tag = 'scoped memory for tpu_custom_call.1']
  %s0 = inlined_call_operand.vmem [shape: f32[16,128], index: 0, kind: input, shape index: {}]
  %s1 = inlined_call_operand.vmem [shape: f32[32,16], index: 1, kind: input, shape index: {}]
  %s2 = inlined_call_operand.vmem [shape: f32[32,1], index: 2, kind: input, shape index: {}]
  %s3 = inlined_call_operand.vmem [shape: f32[32,32], index: 3, kind: input, shape index: {}]
  %s4 = inlined_call_operand.vmem [shape: f32[32,1], index: 4, kind: input, shape index: {}]
  %s5 = inlined_call_operand.vmem [shape: f32[32,1], index: 5, kind: input, shape index: {}]
  %s6 = inlined_call_operand.<no memory space> [shape: f32[1,1], index: 6, kind: input, shape index: {}]
  %s7 = inlined_call_operand.hbm [shape: f32[1,128], index: 7, kind: output, shape index: {}]
  %s8 = sld [smem:[#allocation0]]
  $region38: #{tpu_custom_call.1} parent=0
    _
  %s10 = ssub.s32 1, %s8
  %s11 = scalar_select 0, %s10, %s8
  %12 = sst [smem:[#allocation2]] %s6
  $region1: #{tpu_custom_call.1} parent=0
    #allocation3 [shape = 'u8[512]{0}', space=vmem, size = 0x400, scoped, tag = 'output window, operand 0, single buffered']
    #allocation4 [shape = 's32[1]{0}', space=sflag, size = 0x4, scoped, tag = 'scoped memory for tpu_custom_call.1']
    %13 = vsyncpa [#allocation4], 0
    // Predicated region
    $region2: #{tpu_custom_call.1} parent=1 // pred_check
      _
    $region3: #{tpu_custom_call.1} parent=1 // pred_check_branch
      %15 = sbr.rel (0) target = $region5
    $region4: #{tpu_custom_call.1} parent=1 // pred_region
      _
    $region5: #{tpu_custom_call.1} parent=1 // pred_fallthru
      _
    // Predicated region
    $region6: #{tpu_custom_call.1} parent=1 // pred_check
      _
    $region7: #{tpu_custom_call.1} parent=1 // pred_check_branch
      %17 = sbr.rel (0) target = $region9
    $region8: #{tpu_custom_call.1} parent=1 // pred_region
      _
    $region9: #{tpu_custom_call.1} parent=1 // pred_fallthru
      _
    // Predicated region
    $region10: #{tpu_custom_call.1} parent=1 // pred_check
      _
    $region11: #{tpu_custom_call.1} parent=1 // pred_check_branch
      %19 = sbr.rel (0) target = $region13
    $region12: #{tpu_custom_call.1} parent=1 // pred_region
      _
    $region13: #{tpu_custom_call.1} parent=1 // pred_fallthru
      _
    // Predicated region
    $region14: #{tpu_custom_call.1} parent=1 // pred_check
      _
    $region15: #{tpu_custom_call.1} parent=1 // pred_check_branch
      %21 = sbr.rel (0) target = $region17
    $region16: #{tpu_custom_call.1} parent=1 // pred_region
      _
    $region17: #{tpu_custom_call.1} parent=1 // pred_fallthru
      _
    // Predicated region
    $region18: #{tpu_custom_call.1} parent=1 // pred_check
      _
    $region19: #{tpu_custom_call.1} parent=1 // pred_check_branch
      %23 = sbr.rel (0) target = $region21
    $region20: #{tpu_custom_call.1} parent=1 // pred_region
      _
    $region21: #{tpu_custom_call.1} parent=1 // pred_fallthru
      _
    // Predicated region
    $region22: #{tpu_custom_call.1} parent=1 // pred_check
      _
    $region23: #{tpu_custom_call.1} parent=1 // pred_check_branch
      %25 = sbr.rel (0) target = $region25
    $region24: #{tpu_custom_call.1} parent=1 // pred_region
      _
    $region25: #{tpu_custom_call.1} parent=1 // pred_fallthru
      _
    // Predicated region
    $region26: #{tpu_custom_call.1} parent=1 // pred_check
      _
    $region27: #{tpu_custom_call.1} parent=1 // pred_check_branch
      %27 = sbr.rel (0) target = $region29
    $region28: #{tpu_custom_call.1} parent=1 // pred_region
      _
    $region29: #{tpu_custom_call.1} parent=1 // pred_fallthru
      _
    %v28 = vld [vmem:[%s0] sm:$0xff]
    %v29 = vld [vmem:[%s0 + $0x8] sm:$0xff]
    %v30 = vld [vmem:[%s1] sm:$0xff]
    %v31 = vld [vmem:[%s1 + $0x8] sm:$0xff]
    %v32 = vld [vmem:[%s1 + $0x10] sm:$0xff]
    %v33 = vld [vmem:[%s1 + $0x18] sm:$0xff]
    %v34 = vld [vmem:[%s2] sm:$0xff]
    %v35 = vld [vmem:[%s2 + $0x8] sm:$0xff]
    %v36 = vld [vmem:[%s2 + $0x10] sm:$0xff]
    %v37 = vld [vmem:[%s2 + $0x18] sm:$0xff]
    %39 = vset.pattern.permute.xlu0 0
    %40 = vperm.xlu0 %39, %v34
    %v41 = vpop.permute.xlu0 %40
    %44 = vset.pattern.permute.xlu0 0
    %45 = vperm.xlu0 %44, %v35
    %v46 = vpop.permute.xlu0 %45
    %49 = vset.pattern.permute.xlu0 0
    %50 = vperm.xlu0 %49, %v36
    %v51 = vpop.permute.xlu0 %50
    %54 = vset.pattern.permute.xlu0 0
    %55 = vperm.xlu0 %54, %v37
    %v56 = vpop.permute.xlu0 %55
    %vm58 = vcmask 130048
    %v60 = vsel %vm58, %v30, 0
    %v63 = vsel %vm58, %v31, 0
    %v66 = vsel %vm58, %v32, 0
    %v69 = vsel %vm58, %v33, 0
    %71 = vmatpush.msra.mxu0 0.0
    %72 = vmatpush.msra.mxu0 0.0
    %73 = vmatpush.msra.mxu0 0.0
    %74 = vmatpush.msra.mxu0 0.0
    %75 = vmatpush.msra.mxu0 0.0
    %76 = vmatpush.msra.mxu0 0.0
    %77 = vmatpush.msra.mxu0 0.0
    %78 = vmatpush.msra.mxu0 0.0
    %79 = vmatpush.msra.mxu0 0.0
    %80 = vmatpush.msra.mxu0 0.0
    %81 = vmatpush.msra.mxu0 0.0
    %82 = vmatpush.msra.mxu0 0.0
    %83 = vmatpush.msra.mxu0 0.0
    %84 = vmatpush.msra.mxu0 0.0
    %85 = vmatpush.msra.mxu0 %v29
    %86 = vmatpush.msra.mxu0 %v28
    %87 = vmatmul.f32.gmra.mxu0 %v60
    %v88 = vpop.f32.mrf.mxu0
    %v89 = vadd.f32 %v41, %v88
    %90 = vmatmul.f32.gmra.mxu0 %v63
    %v91 = vpop.f32.mrf.mxu0
    %v92 = vadd.f32 %v46, %v91
    %93 = vmatmul.f32.gmra.mxu0 %v66
    %v94 = vpop.f32.mrf.mxu0
    %v95 = vadd.f32 %v51, %v94
    %96 = vmatmul.f32.gmra.mxu0 %v69
    %v97 = vpop.f32.mrf.mxu0
    %v98 = vadd.f32 %v56, %v97
    %99 = vdwg.mxu0
    %v100 = vmax.f32 %v89, 0.0
    %v101 = vmax.f32 %v92, 0.0
    %v102 = vmax.f32 %v95, 0.0
    %v103 = vmax.f32 %v98, 0.0
    %v104 = vld [vmem:[%s3] sm:$0xff]
    %v105 = vld [vmem:[%s3 + $0x8] sm:$0xff]
    %v106 = vld [vmem:[%s3 + $0x10] sm:$0xff]
    %v107 = vld [vmem:[%s3 + $0x18] sm:$0xff]
    %v108 = vld [vmem:[%s4] sm:$0xff]
    %v109 = vld [vmem:[%s4 + $0x8] sm:$0xff]
    %v110 = vld [vmem:[%s4 + $0x10] sm:$0xff]
    %v111 = vld [vmem:[%s4 + $0x18] sm:$0xff]
    %113 = vset.pattern.permute.xlu0 0
    %114 = vperm.xlu0 %113, %v108
    %v115 = vpop.permute.xlu0 %114
    %118 = vset.pattern.permute.xlu0 0
    %119 = vperm.xlu0 %118, %v109
    %v120 = vpop.permute.xlu0 %119
    %123 = vset.pattern.permute.xlu0 0
    %124 = vperm.xlu0 %123, %v110
    %v125 = vpop.permute.xlu0 %124
    %128 = vset.pattern.permute.xlu0 0
    %129 = vperm.xlu0 %128, %v111
    %v130 = vpop.permute.xlu0 %129
    %vm132 = vcmask 261120
    %v134 = vsel %vm132, %v104, 0
    %v137 = vsel %vm132, %v105, 0
    %v140 = vsel %vm132, %v106, 0
    %v143 = vsel %vm132, %v107, 0
    %145 = vmatpush.msra.mxu0 0.0
    %146 = vmatpush.msra.mxu0 0.0
    %147 = vmatpush.msra.mxu0 0.0
    %148 = vmatpush.msra.mxu0 0.0
    %149 = vmatpush.msra.mxu0 0.0
    %150 = vmatpush.msra.mxu0 0.0
    %151 = vmatpush.msra.mxu0 0.0
    %152 = vmatpush.msra.mxu0 0.0
    %153 = vmatpush.msra.mxu0 0.0
    %154 = vmatpush.msra.mxu0 0.0
    %155 = vmatpush.msra.mxu0 0.0
    %156 = vmatpush.msra.mxu0 0.0
    %157 = vmatpush.msra.mxu0 %v103
    %158 = vmatpush.msra.mxu0 %v102
    %159 = vmatpush.msra.mxu0 %v101
    %160 = vmatpush.msra.mxu0 %v100
    %161 = vmatmul.f32.gmra.mxu0 %v134
    %v162 = vpop.f32.mrf.mxu0
    %v163 = vadd.f32 %v115, %v162
    %164 = vmatmul.f32.gmra.mxu0 %v137
    %v165 = vpop.f32.mrf.mxu0
    %v166 = vadd.f32 %v120, %v165
    %167 = vmatmul.f32.gmra.mxu0 %v140
    %v168 = vpop.f32.mrf.mxu0
    %v169 = vadd.f32 %v125, %v168
    %170 = vmatmul.f32.gmra.mxu0 %v143
    %v171 = vpop.f32.mrf.mxu0
    %v172 = vadd.f32 %v130, %v171
    %173 = vdwg.mxu0
    %v174 = vmax.f32 %v163, 0.0
    %v175 = vmax.f32 %v166, 0.0
    %v176 = vmax.f32 %v169, 0.0
    %v177 = vmax.f32 %v172, 0.0
    %v178 = vld [vmem:[%s5] sm:$0xff]
    %v179 = vld [vmem:[%s5 + $0x8] sm:$0xff]
    %v180 = vld [vmem:[%s5 + $0x10] sm:$0xff]
    %v181 = vld [vmem:[%s5 + $0x18] sm:$0xff]
    %183 = vset.pattern.permute.xlu0 0
    %184 = vperm.xlu0 %183, %v178
    %v185 = vpop.permute.xlu0 %184
    %188 = vset.pattern.permute.xlu0 0
    %189 = vperm.xlu0 %188, %v179
    %v190 = vpop.permute.xlu0 %189
    %193 = vset.pattern.permute.xlu0 0
    %194 = vperm.xlu0 %193, %v180
    %v195 = vpop.permute.xlu0 %194
    %198 = vset.pattern.permute.xlu0 0
    %199 = vperm.xlu0 %198, %v181
    %v200 = vpop.permute.xlu0 %199
    %v202 = vmul.f32 %v174, %v185
    %v203 = vmul.f32 %v175, %v190
    %v204 = vmul.f32 %v176, %v195
    %v205 = vmul.f32 %v177, %v200
    %v206 = vadd.f32 %v202, %v203
    %v207 = vadd.f32 %v206, %v204
    %v208 = vadd.f32 %v207, %v205
    %v209 = vrot.slane %v208, 4
    %v210 = vadd.f32 %v208, %v209
    %v211 = vrot.slane %v210, 2
    %v212 = vadd.f32 %v210, %v211
    %v213 = vrot.slane %v212, 1
    %v214 = vadd.f32 %v212, %v213
    %s215 = sld [smem:[#allocation2]]
    %v216 = vstv %s215
    %v217 = vadd.f32 %v214, %v216
    %218 = vst [vmem:[#allocation3] sm:$0x1] %v217
    // Predicated region
    $region30: #{tpu_custom_call.1} parent=1 // pred_check
      _
    $region31: #{tpu_custom_call.1} parent=1 // pred_check_branch
      %220 = sbr.rel (0) target = $region33
    $region32: #{tpu_custom_call.1} parent=1 // pred_region
      %222 = vsyncadd [#allocation4], 0
      %s224 = sshll.u32 [#allocation3], 4
      %s225 = int_to_ptr.vmem [resolvable:$true] %s224
      %s226 = sshll.u32 %s7, 4
      %s227 = int_to_ptr.hbm [resolvable:$true] %s226
      %229 = dma.vmem_to_hbm [thread:$0]  %s225, 16, %s227, [#allocation4]
    $region33: #{tpu_custom_call.1} parent=1 // pred_fallthru
      _
    // Predicated region
    $region34: #{tpu_custom_call.1} parent=1 // pred_check
      _
    $region35: #{tpu_custom_call.1} parent=1 // pred_check_branch
      %231 = sbr.rel (0) target = $region37
    $region36: #{tpu_custom_call.1} parent=1 // pred_region
      %233 = dma.done [#allocation4], 16
    $region37: #{tpu_custom_call.1} parent=1 // pred_fallthru
      _
    %234 = vsyncpa [#allocation4], 1

</llo_original>
